<compile_context>
chip_gen: v5e
topology: v5e:2x2
jax: 0.10.0
libtpu: 0.0.40
codegen_flags: <defaults>
</compile_context>

<pallas_src>
import jax
import jax.numpy as jnp
from jax.experimental import pallas as pl
from jax.experimental.pallas import tpu as pltpu


def _outconv_kernel(x_ref, w_ref, b_ref, o_ref):
    # x_ref: (nb, C_in, tp), w_ref: (C_out, C_in), b_ref: (C_out, 1),
    # o_ref: (nb, C_out, tp).  nb is a small static constant, so the loop is
    # unrolled into clean (C_out, C_in) @ (C_in, tp) matmuls with lane-dense
    # stores.  (A VPU multiply-add path for tiny channel counts is possible but
    # HBM bandwidth is the bound, so the dot is kept for simplicity.)
    w = w_ref[...]
    b = b_ref[...].astype(jnp.float32)            # (C_out, 1), broadcasts over tp
    nb = x_ref.shape[0]
    for i in range(nb):
        acc = jnp.dot(w, x_ref[i], preferred_element_type=jnp.float32)
        o_ref[i] = (acc + b).astype(o_ref.dtype)


def _ceil_div(a, b):
    return -(-a // b)


def _vmem_budget_bytes():
    """Returns (tile budget bytes, vmem_limit_bytes), sized per TPU generation."""
    phys = None
    try:
        phys = pltpu.get_tpu_info().vmem_capacity_bytes
    except Exception:
        phys = None
    if phys is not None and phys >= 100 * 1024 * 1024:
        # v5e / v6e: 128 MiB physical VMEM -> big tiles, raised scoped limit.
        return 48 * 1024 * 1024, 96 * 1024 * 1024
    # v7x (64 MiB physical, 32 MiB default scoped) or unknown: stay conservative.
    return 20 * 1024 * 1024, 32 * 1024 * 1024


def _choose_tiling(N, C_in, C_out, HW, in_itemsize, out_itemsize, budget_bytes):
    """Pick (nb, tp): batch block and pixel tile, sized against the VMEM budget."""
    # Live VMEM per pixel-column per image:
    #   2 double-buffered x tiles + 2 double-buffered out tiles (true dtypes)
    #   + f32 (C_out, tp) accumulator temporary + slack for matmul staging.
    per_px = (2 * C_in * in_itemsize
              + 2 * C_out * out_itemsize
              + 4 * C_out
              + 2 * C_in * in_itemsize)           # slack / staging headroom
    px_cap = max(256, budget_bytes // per_px)     # pixels of budget (per image)
    px_cap = min(px_cap, 65536)                   # diminishing returns past ~64k

    if HW <= px_cap:
        # Small spatial extent: take all of HW per step; block over batch so
        # each grid step is one big contiguous (nb, C_in, HW) DMA.
        tp = HW
        nb = max(1, min(N, 8, px_cap // max(HW, 1)))
        # Megacore: keep >= ~4 batch blocks when the batch is big enough.
        while nb > 1 and _ceil_div(N, nb) < 4 and N >= 4:
            nb = max(1, nb // 2)
    else:
        # Large images: one image per step, big lane-dense pixel tiles.
        nb = 1
        tp = max(128, (px_cap // 128) * 128)
        # Megacore / pipelining: keep a handful of pixel blocks when possible,
        # but never shrink a step below ~8k pixels (per-step overhead).
        while tp > 8192 and N * _ceil_div(HW, tp) < 8:
            tp = max(8192, ((tp // 2) // 128) * 128)
    return nb, tp


def outconv(x_nchw, weight, bias):
    """1x1 conv (== nn.Conv2d(C_in, C_out, kernel_size=1)).

    x_nchw: (N, C_in, H, W), weight: (C_out, C_in, 1, 1), bias: (C_out,).
    """
    N, C_in, H, W = x_nchw.shape
    C_out = weight.shape[0]
    HW = H * W

    # Reshapes only (no transposes / no HBM shuffle passes).
    x_flat = x_nchw.reshape(N, C_in, HW)          # (N, C_in, HW)
    w_mat = weight.reshape(C_out, C_in)           # (C_out, C_in)
    b_col = bias.reshape(C_out, 1)                # (C_out, 1)

    in_itemsize = jnp.dtype(x_flat.dtype).itemsize
    out_dtype = x_flat.dtype
    out_itemsize = jnp.dtype(out_dtype).itemsize

    budget_bytes, vmem_limit = _vmem_budget_bytes()
    nb, tp = _choose_tiling(N, C_in, C_out, HW, in_itemsize, out_itemsize,
                            budget_bytes)

    grid = (_ceil_div(N, nb), _ceil_div(HW, tp))

    flops = 2 * N * HW * C_in * C_out
    bytes_accessed = (
        N * HW * C_in * in_itemsize       # read x
        + N * HW * C_out * out_itemsize   # write y
        + C_out * C_in * in_itemsize      # read weight
        + C_out * in_itemsize             # read bias
    )

    out_flat = pl.pallas_call(
        _outconv_kernel,
        out_shape=jax.ShapeDtypeStruct((N, C_out, HW), out_dtype),
        grid_spec=pltpu.PrefetchScalarGridSpec(
            num_scalar_prefetch=0,
            grid=grid,
            in_specs=[
                # Batched slab: (nb, C_in, tp). Contiguous in HBM when tp == HW.
                pl.BlockSpec((nb, C_in, tp), lambda n, p: (n, 0, p)),
                # Weight / bias are tiny and resident (constant index maps).
                # Their default double-buffer is only a few hundred bytes, so the
                # Buffered(1) micro-opt is intentionally skipped for portability.
                pl.BlockSpec((C_out, C_in), lambda n, p: (0, 0)),
                pl.BlockSpec((C_out, 1), lambda n, p: (0, 0)),
            ],
            # Lane-dense output: last dim tp is a multiple of 128 or the full HW.
            out_specs=pl.BlockSpec((nb, C_out, tp), lambda n, p: (n, 0, p)),
        ),
        compiler_params=pltpu.CompilerParams(
            dimension_semantics=("parallel", "parallel"),
            vmem_limit_bytes=vmem_limit,
        ),
        cost_estimate=pl.CostEstimate(
            flops=flops, transcendentals=0, bytes_accessed=bytes_accessed),
    )(x_flat, w_mat, b_col)

    return out_flat.reshape(N, C_out, H, W)


if __name__ == "__main__":
    key = jax.random.PRNGKey(0)
    kx, kw, kb = jax.random.split(key, 3)

    N, C_in, H, W = 2, 4, 16, 16
    C_out = 3

    x = jax.random.normal(kx, (N, C_in, H, W), dtype=jnp.float32)
    # Deterministic parameter init (shapes match nn.Conv2d(C_in, C_out, kernel_size=1)).
    bound = 1.0 / (C_in ** 0.5)
    weight = jax.random.uniform(kw, (C_out, C_in, 1, 1), jnp.float32, -bound, bound)
    bias = jax.random.uniform(kb, (C_out,), jnp.float32, -bound, bound)

    y = outconv(x, weight, bias)
    jax.block_until_ready(y)

    # Reference check against plain-JAX 1x1 conv semantics (== torch Conv2d k=1).
    y_ref = (jnp.einsum("nchw,oc->nohw", x, weight.reshape(C_out, C_in))
             + bias[None, :, None, None])
    assert y.shape == (N, C_out, H, W)
    assert jnp.allclose(y, y_ref, atol=1e-5, rtol=1e-5)

    print("KERNEL_OK")
</pallas_src>

<mosaic_0001>
module attributes {stable_mosaic.version = 11 : i64} {
  func.func @_outconv_kernel(%arg0: i32, %arg1: i32, %arg2: memref<2x4x256xf32, #tpu.memory_space<vmem>>, %arg3: memref<3x4xf32, #tpu.memory_space<vmem>>, %arg4: memref<3x1xf32, #tpu.memory_space<vmem>>, %arg5: memref<2x3x256xf32, #tpu.memory_space<vmem>>) attributes {dimension_semantics = [#tpu.dimension_semantics<parallel>, #tpu.dimension_semantics<parallel>], iteration_bounds = array<i64: 1, 1>, scalar_prefetch = 0 : i64, scratch_operands = 0 : i64, tpu.core_type = #tpu.core_type<tc>, window_params = [{transform_indices = @transform_0, window_bounds = array<i64: 2, 4, 256>}, {pipeline_mode = #tpu.pipeline_mode<synchronous>, transform_indices = @transform_1, window_bounds = array<i64: 3, 4>}, {pipeline_mode = #tpu.pipeline_mode<synchronous>, transform_indices = @transform_2, window_bounds = array<i64: 3, 1>}, {transform_indices = @transform_3, window_bounds = array<i64: 2, 3, 256>}]} {
    %c0 = arith.constant 0 : index
    %c0_0 = arith.constant 0 : index
    %0 = vector.load %arg3[%c0, %c0_0] : memref<3x4xf32, #tpu.memory_space<vmem>>, vector<3x4xf32>
    %c0_1 = arith.constant 0 : index
    %c0_2 = arith.constant 0 : index
    %1 = vector.load %arg4[%c0_1, %c0_2] : memref<3x1xf32, #tpu.memory_space<vmem>>, vector<3x1xf32>
    %c0_3 = arith.constant 0 : index
    %c0_4 = arith.constant 0 : index
    %c0_5 = arith.constant 0 : index
    %2 = vector.load %arg2[%c0_3, %c0_4, %c0_5] : memref<2x4x256xf32, #tpu.memory_space<vmem>>, vector<1x4x256xf32>
    %3 = vector.shape_cast %2 : vector<1x4x256xf32> to vector<4x256xf32>
    %cst = arith.constant dense<0.000000e+00> : vector<3x256xf32>
    %4 = tpu.matmul %0, %3, %cst {dimension_numbers = #tpu.dot_dimension_numbers<[1], [0], [0], [1], [0, 0, 1, 1], [], []>} : vector<3x4xf32>, vector<4x256xf32>, vector<3x256xf32> -> vector<3x256xf32>
    %5 = vector.broadcast %1 : vector<3x1xf32> to vector<3x256xf32>
    %6 = arith.addf %4, %5 : vector<3x256xf32>
    %c0_6 = arith.constant 0 : index
    %c0_7 = arith.constant 0 : index
    %c0_8 = arith.constant 0 : index
    %7 = vector.load %arg5[%c0_6, %c0_7, %c0_8] : memref<2x3x256xf32, #tpu.memory_space<vmem>>, vector<1x3x256xf32>
    %8 = vector.shape_cast %7 : vector<1x3x256xf32> to vector<3x256xf32>
    %9 = vector.shape_cast %6 : vector<3x256xf32> to vector<1x3x256xf32>
    tpu.vector_store %arg5[%c0_6, %c0_7, %c0_8], %9 {strides = array<i32>} : memref<2x3x256xf32, #tpu.memory_space<vmem>>, vector<1x3x256xf32>,
    %c1 = arith.constant 1 : index
    %c0_9 = arith.constant 0 : index
    %c0_10 = arith.constant 0 : index
    %10 = vector.load %arg2[%c1, %c0_9, %c0_10] : memref<2x4x256xf32, #tpu.memory_space<vmem>>, vector<1x4x256xf32>
    %11 = vector.shape_cast %10 : vector<1x4x256xf32> to vector<4x256xf32>
    %cst_11 = arith.constant dense<0.000000e+00> : vector<3x256xf32>
    %12 = tpu.matmul %0, %11, %cst_11 {dimension_numbers = #tpu.dot_dimension_numbers<[1], [0], [0], [1], [0, 0, 1, 1], [], []>} : vector<3x4xf32>, vector<4x256xf32>, vector<3x256xf32> -> vector<3x256xf32>
    %13 = vector.broadcast %1 : vector<3x1xf32> to vector<3x256xf32>
    %14 = arith.addf %12, %13 : vector<3x256xf32>
    %c1_12 = arith.constant 1 : index
    %c0_13 = arith.constant 0 : index
    %c0_14 = arith.constant 0 : index
    %15 = vector.load %arg5[%c1_12, %c0_13, %c0_14] : memref<2x3x256xf32, #tpu.memory_space<vmem>>, vector<1x3x256xf32>
    %16 = vector.shape_cast %15 : vector<1x3x256xf32> to vector<3x256xf32>
    %17 = vector.shape_cast %14 : vector<3x256xf32> to vector<1x3x256xf32>
    tpu.vector_store %arg5[%c1_12, %c0_13, %c0_14], %17 {strides = array<i32>} : memref<2x3x256xf32, #tpu.memory_space<vmem>>, vector<1x3x256xf32>,
    return
  }
  func.func @transform_0(%arg0: i32, %arg1: i32) -> (i32, i32, i32) {
    %c0_i32 = arith.constant 0 : i32
    %c0_i32_0 = arith.constant 0 : i32
    return %arg0, %c0_i32, %arg1 : i32, i32, i32
  }
  func.func @transform_1(%arg0: i32, %arg1: i32) -> (i32, i32) {
    %c0_i32 = arith.constant 0 : i32
    %c0_i32_0 = arith.constant 0 : i32
    %c0_i32_1 = arith.constant 0 : i32
    return %c0_i32, %c0_i32_0 : i32, i32
  }
  func.func @transform_2(%arg0: i32, %arg1: i32) -> (i32, i32) {
    %c0_i32 = arith.constant 0 : i32
    %c0_i32_0 = arith.constant 0 : i32
    %c0_i32_1 = arith.constant 0 : i32
    return %c0_i32, %c0_i32_0 : i32, i32
  }
  func.func @transform_3(%arg0: i32, %arg1: i32) -> (i32, i32, i32) {
    %c0_i32 = arith.constant 0 : i32
    %c0_i32_0 = arith.constant 0 : i32
    return %arg0, %c0_i32, %arg1 : i32, i32, i32
  }
}

</mosaic_0001>

<llo_original>
// kernel: tpu_custom_call.1
$region0: #{tpu_custom_call.1}
  #allocation0 [shape = 'u32[]', space=smem, size = 0x4, offset = 0x4, fixed_abs, tag = 'smem constant byte address 0x4 - core index']
  #allocation1 [shape = 'u32[72,128]{1,0:T(1,128)}', space=vmem, size = 0x9000, scoped, tag = 'internal scratch']
  %s0 = inlined_call_operand.hbm [shape: f32[2,4,256], index: 0, kind: input, shape index: {}]
  %s1 = inlined_call_operand.vmem [shape: f32[3,4], index: 1, kind: input, shape index: {}]
  %s2 = inlined_call_operand.vmem [shape: f32[3,1], index: 2, kind: input, shape index: {}]
  %s3 = inlined_call_operand.vmem [shape: f32[2,3,256], index: 3, kind: output, shape index: {}]
  %s4 = sld [smem:[#allocation0]]
  $region26: #{tpu_custom_call.1} parent=0
    _
  %s6 = ssub.s32 1, %s4
  %s7 = scalar_select 0, %s6, %s4
  $region1: #{tpu_custom_call.1} parent=0
    #allocation2 [shape = 'u8[8192]{0}', space=vmem, size = 0x2000, scoped, tag = 'input window, operand 0, single buffered']
    #allocation3 [shape = 's32[1]{0}', space=sflag, size = 0x4, scoped, tag = 'scoped memory for tpu_custom_call.1']
    %8 = vsyncpa [#allocation3], 0
    // Predicated region
    $region2: #{tpu_custom_call.1} parent=1 // pred_check
      _
    $region3: #{tpu_custom_call.1} parent=1 // pred_check_branch
      %10 = sbr.rel (0) target = $region5
    $region4: #{tpu_custom_call.1} parent=1 // pred_region
      %12 = vsyncadd [#allocation3], 0
      %s13 = sshll.u32 %s0, 4
      %s14 = int_to_ptr.hbm [resolvable:$true] %s13
      %s15 = sshll.u32 [#allocation2], 4
      %s16 = int_to_ptr.vmem [resolvable:$true] %s15
      %21 = dma.hbm_to_vmem [thread:$0]  %s14, 256, %s16, [#allocation3], 128, 128, 8
    $region5: #{tpu_custom_call.1} parent=1 // pred_fallthru
      _
    // Predicated region
    $region6: #{tpu_custom_call.1} parent=1 // pred_check
      _
    $region7: #{tpu_custom_call.1} parent=1 // pred_check_branch
      %23 = sbr.rel (0) target = $region9
    $region8: #{tpu_custom_call.1} parent=1 // pred_region
      _
    $region9: #{tpu_custom_call.1} parent=1 // pred_fallthru
      _
    // Predicated region
    $region10: #{tpu_custom_call.1} parent=1 // pred_check
      _
    $region11: #{tpu_custom_call.1} parent=1 // pred_check_branch
      %25 = sbr.rel (0) target = $region13
    $region12: #{tpu_custom_call.1} parent=1 // pred_region
      _
    $region13: #{tpu_custom_call.1} parent=1 // pred_fallthru
      _
    // Predicated region
    $region14: #{tpu_custom_call.1} parent=1 // pred_check
      _
    $region15: #{tpu_custom_call.1} parent=1 // pred_check_branch
      %27 = sbr.rel (0) target = $region17
    $region16: #{tpu_custom_call.1} parent=1 // pred_region
      %29 = dma.done [#allocation3], 256
    $region17: #{tpu_custom_call.1} parent=1 // pred_fallthru
      _
    %v30 = vld [vmem:[%s1] sm:$0x7]
    %v31 = vld [vmem:[%s2] sm:$0x7]
    %v32 = vld [vmem:[#allocation2] sm:$0xff]
    %34 = vset.pattern.permute.xlu0 0
    %35 = vperm.xlu0 %34, %v31
    %v36 = vpop.permute.xlu0 %35
    %39 = vst [vmem:[#allocation1] ss:$2 sm:$0xff] %v32
    %v40 = vld.sshfl [vmem:[#allocation1] sm:$0xff pattern:$0x75316420]
    %v41 = vld.sshfl [vmem:[#allocation1 + $0x8] sm:$0xff pattern:$0x75316420]
    %vm42 = vcmask 31744
    %v44 = vsel %vm42, %v30, 0
    %vm46 = vcmask 1043456
    %v47 = vsel %vm46, %v40, 0
    %v49 = vsel %vm46, %v41, 0
    %51 = vmatpush.msra.mxu0 0.0
    %52 = vmatpush.msra.mxu0 0.0
    %53 = vmatpush.msra.mxu0 0.0
    %54 = vmatpush.msra.mxu0 0.0
    %55 = vmatpush.msra.mxu0 0.0
    %56 = vmatpush.msra.mxu0 0.0
    %57 = vmatpush.msra.mxu0 0.0
    %58 = vmatpush.msra.mxu0 0.0
    %59 = vmatpush.msra.mxu0 0.0
    %60 = vmatpush.msra.mxu0 0.0
    %61 = vmatpush.msra.mxu0 0.0
    %62 = vmatpush.msra.mxu0 0.0
    %63 = vmatpush.msra.mxu0 0.0
    %64 = vmatpush.msra.mxu0 0.0
    %65 = vmatpush.msra.mxu0 0.0
    %66 = vmatpush.msra.mxu0 %v47
    %67 = vmatmul.f32.gmra.mxu0 %v44
    %v68 = vpop.f32.mrf.mxu0
    %v69 = vadd.f32 %v36, %v68
    %70 = vdwg.mxu0
    %71 = vmatpush.msra.mxu0 0.0
    %72 = vmatpush.msra.mxu0 0.0
    %73 = vmatpush.msra.mxu0 0.0
    %74 = vmatpush.msra.mxu0 0.0
    %75 = vmatpush.msra.mxu0 0.0
    %76 = vmatpush.msra.mxu0 0.0
    %77 = vmatpush.msra.mxu0 0.0
    %78 = vmatpush.msra.mxu0 0.0
    %79 = vmatpush.msra.mxu0 0.0
    %80 = vmatpush.msra.mxu0 0.0
    %81 = vmatpush.msra.mxu0 0.0
    %82 = vmatpush.msra.mxu0 0.0
    %83 = vmatpush.msra.mxu0 0.0
    %84 = vmatpush.msra.mxu0 0.0
    %85 = vmatpush.msra.mxu0 0.0
    %86 = vmatpush.msra.mxu0 %v49
    %87 = vmatmul.f32.gmra.mxu0 %v44
    %v88 = vpop.f32.mrf.mxu0
    %v89 = vadd.f32 %v36, %v88
    %90 = vdwg.mxu0
    %v93 = vrot.slane %v89, 4
    %v94 = vsel %vm46, %v69, %v93
    %96 = vst [vmem:[%s3] sm:$0x77] %v94
    %s97 = scalar_lea.vmem [#allocation2], 8
    %v98 = vld [vmem:[%s97] sm:$0xff]
    %100 = vst [vmem:[#allocation1] ss:$2 sm:$0xff] %v98
    %v101 = vld.sshfl [vmem:[#allocation1] sm:$0xff pattern:$0x75316420]
    %v102 = vld.sshfl [vmem:[#allocation1 + $0x8] sm:$0xff pattern:$0x75316420]
    %v103 = vsel %vm46, %v101, 0
    %v105 = vsel %vm46, %v102, 0
    %107 = vmatpush.msra.mxu0 0.0
    %108 = vmatpush.msra.mxu0 0.0
    %109 = vmatpush.msra.mxu0 0.0
    %110 = vmatpush.msra.mxu0 0.0
    %111 = vmatpush.msra.mxu0 0.0
    %112 = vmatpush.msra.mxu0 0.0
    %113 = vmatpush.msra.mxu0 0.0
    %114 = vmatpush.msra.mxu0 0.0
    %115 = vmatpush.msra.mxu0 0.0
    %116 = vmatpush.msra.mxu0 0.0
    %117 = vmatpush.msra.mxu0 0.0
    %118 = vmatpush.msra.mxu0 0.0
    %119 = vmatpush.msra.mxu0 0.0
    %120 = vmatpush.msra.mxu0 0.0
    %121 = vmatpush.msra.mxu0 0.0
    %122 = vmatpush.msra.mxu0 %v103
    %123 = vmatmul.f32.gmra.mxu0 %v44
    %v124 = vpop.f32.mrf.mxu0
    %v125 = vadd.f32 %v36, %v124
    %126 = vdwg.mxu0
    %127 = vmatpush.msra.mxu0 0.0
    %128 = vmatpush.msra.mxu0 0.0
    %129 = vmatpush.msra.mxu0 0.0
    %130 = vmatpush.msra.mxu0 0.0
    %131 = vmatpush.msra.mxu0 0.0
    %132 = vmatpush.msra.mxu0 0.0
    %133 = vmatpush.msra.mxu0 0.0
    %134 = vmatpush.msra.mxu0 0.0
    %135 = vmatpush.msra.mxu0 0.0
    %136 = vmatpush.msra.mxu0 0.0
    %137 = vmatpush.msra.mxu0 0.0
    %138 = vmatpush.msra.mxu0 0.0
    %139 = vmatpush.msra.mxu0 0.0
    %140 = vmatpush.msra.mxu0 0.0
    %141 = vmatpush.msra.mxu0 0.0
    %142 = vmatpush.msra.mxu0 %v105
    %143 = vmatmul.f32.gmra.mxu0 %v44
    %v144 = vpop.f32.mrf.mxu0
    %v145 = vadd.f32 %v36, %v144
    %146 = vdwg.mxu0
    %v149 = vrot.slane %v145, 4
    %v150 = vsel %vm46, %v125, %v149
    %s152 = scalar_lea.vmem %s3, 8
    %153 = vst [vmem:[%s152] sm:$0x77] %v150
    // Predicated region
    $region18: #{tpu_custom_call.1} parent=1 // pred_check
      _
    $region19: #{tpu_custom_call.1} parent=1 // pred_check_branch
      %155 = sbr.rel (0) target = $region21
    $region20: #{tpu_custom_call.1} parent=1 // pred_region
      _
    $region21: #{tpu_custom_call.1} parent=1 // pred_fallthru
      _
    // Predicated region
    $region22: #{tpu_custom_call.1} parent=1 // pred_check
      _
    $region23: #{tpu_custom_call.1} parent=1 // pred_check_branch
      %157 = sbr.rel (0) target = $region25
    $region24: #{tpu_custom_call.1} parent=1 // pred_region
      _
    $region25: #{tpu_custom_call.1} parent=1 // pred_fallthru
      _
    %158 = vsyncpa [#allocation3], 1

</llo_original>
